<compile_context>
chip_gen: v7x
topology: tpu7x:2x2x1
jax: 0.10.0
libtpu: 0.0.40
codegen_flags: <defaults>
</compile_context>

<pallas_src>
import functools
import math

import jax
import jax.numpy as jnp
from jax.experimental import pallas as pl
from jax.experimental.pallas import tpu as pltpu

_LANE = 128


def _round_up(x, m):
    return ((x + m - 1) // m) * m


def _vmem_budget_bytes():
    """~75% of this generation's physical VMEM (48 MiB v7x, 96 MiB v5e/v6e)."""
    cap = 64 * 1024 * 1024
    try:
        cap = int(pltpu.get_tpu_info().vmem_capacity_bytes)
    except Exception:  # conservative fallback if the query is unavailable
        pass
    return (cap * 3) // 4


# ----------------------------------------------------------------------------
# Fused multi-layer propagation kernel (x / out VMEM-resident, A streamed)
# ----------------------------------------------------------------------------
def _fused_propagate_kernel(alpha_ref, a_ref, x0_ref, out_ref, xbuf, acc,
                            *, tile_m, tile_k, n_pad):
    """All L LGConv layers in one grid: grid = (L, row tiles, k tiles).

    xbuf : (2 * n_pad, Dp) bf16 VMEM ping-pong buffer holding x^(l) / x^(l+1).
    acc  : (tile_m, Dp) f32 scratch accumulating one row tile's k-reduction.
    out  : (n_pad, Dp) f32 output block, VMEM-resident across the whole grid
           (constant index map) and written back to HBM only once.
    """
    l = pl.program_id(0)
    i = pl.program_id(1)
    k = pl.program_id(2)
    last_k = pl.num_programs(2) - 1

    # One-time init: seed the ping buffer with x^(0), out with alpha_0 * x^(0).
    @pl.when((l == 0) & (i == 0) & (k == 0))
    def _():
        x0 = x0_ref[...]
        xbuf[0:n_pad, :] = x0.astype(xbuf.dtype)
        out_ref[...] = alpha_ref[0] * x0

    slot = l % 2                         # layer l reads slot, writes 1 - slot
    read_start = pl.multiple_of(slot * n_pad + k * tile_k, _LANE)
    part = jnp.dot(a_ref[...],
                   xbuf[pl.ds(read_start, tile_k), :],
                   preferred_element_type=jnp.float32)

    @pl.when(k == 0)
    def _():
        acc[...] = part

    @pl.when(k != 0)
    def _():
        acc[...] = acc[...] + part

    # Row tile of x^(l+1) complete: commit to the other ping-pong slot and
    # fold alpha_{l+1} * x^(l+1) into the resident output accumulator.
    @pl.when(k == last_k)
    def _():
        new_x = acc[...]
        write_start = pl.multiple_of((1 - slot) * n_pad + i * tile_m, _LANE)
        xbuf[pl.ds(write_start, tile_m), :] = new_x.astype(xbuf.dtype)
        row = pl.multiple_of(i * tile_m, _LANE)
        out_ref[pl.ds(row, tile_m), :] = (
            out_ref[pl.ds(row, tile_m), :] + alpha_ref[l + 1] * new_x)


def _propagate_fused(Ap, x0p, alpha, num_layers, *, tile_m, tile_k,
                     n_pad, d_pad, vmem_limit):
    grid = (num_layers, n_pad // tile_m, n_pad // tile_k)
    kernel = functools.partial(_fused_propagate_kernel,
                               tile_m=tile_m, tile_k=tile_k, n_pad=n_pad)
    cost = pl.CostEstimate(
        flops=2 * num_layers * n_pad * n_pad * d_pad,
        transcendentals=0,
        bytes_accessed=(num_layers * n_pad * n_pad * 2   # A streamed per layer
                        + n_pad * d_pad * 4               # x^(0) in
                        + n_pad * d_pad * 4))             # out write
    return pl.pallas_call(
        kernel,
        out_shape=jax.ShapeDtypeStruct((n_pad, d_pad), jnp.float32),
        grid=grid,
        in_specs=[
            pl.BlockSpec(memory_space=pltpu.MemorySpace.SMEM),        # alpha
            pl.BlockSpec((tile_m, tile_k), lambda l, i, k: (i, k)),   # A tile
            pl.BlockSpec((n_pad, d_pad), lambda l, i, k: (0, 0)),     # x^(0)
        ],
        out_specs=pl.BlockSpec((n_pad, d_pad), lambda l, i, k: (0, 0)),
        scratch_shapes=[
            pltpu.VMEM((2 * n_pad, d_pad), jnp.bfloat16),   # x ping-pong
            pltpu.VMEM((tile_m, d_pad), jnp.float32),       # k-reduction acc
        ],
        compiler_params=pltpu.CompilerParams(
            # Layer and row axes couple through the VMEM-resident state, so
            # every axis is sequential ("arbitrary"); megacore split is given
            # up here in exchange for zero x/out HBM traffic.
            dimension_semantics=("arbitrary", "arbitrary", "arbitrary"),
            vmem_limit_bytes=vmem_limit),
        cost_estimate=cost,
    )(alpha, Ap, x0p)


# ----------------------------------------------------------------------------
# Streaming per-layer fallback (node state does not fit in VMEM)
# ----------------------------------------------------------------------------
def _layer_propagate_kernel(alpha_ref, a_ref, x_ref, out_in_ref,
                            x_out_ref, out_out_ref, acc):
    """One LGConv layer: x^(l+1) = A @ x^(l) ; out += alpha_l * x^(l+1).

    Grid = (row tiles, k tiles). x^(l) streams from HBM as bf16; the
    k-reduction accumulates in the f32 scratch and is committed once per row
    tile (bf16 x^(l+1), f32 out).
    """
    k = pl.program_id(1)
    part = jnp.dot(a_ref[...], x_ref[...], preferred_element_type=jnp.float32)

    @pl.when(k == 0)
    def _():
        acc[...] = part

    @pl.when(k != 0)
    def _():
        acc[...] = acc[...] + part

    @pl.when(k == pl.num_programs(1) - 1)
    def _():
        x_out_ref[...] = acc[...].astype(x_out_ref.dtype)
        out_out_ref[...] = out_in_ref[...] + alpha_ref[0] * acc[...]


def _propagate_streaming(Ap, x0p, alpha, num_layers, *, tile_m, tile_k,
                         n_pad, d_pad, vmem_limit):
    grid = (n_pad // tile_m, n_pad // tile_k)
    grid_m = grid[0]
    cost = pl.CostEstimate(
        flops=2 * n_pad * n_pad * d_pad,
        transcendentals=0,
        bytes_accessed=(n_pad * n_pad * 2               # A
                        + grid_m * n_pad * d_pad * 2    # x re-read per row tile
                        + n_pad * d_pad * 2             # x^(l+1) write
                        + 2 * n_pad * d_pad * 4))       # out read + write
    call = pl.pallas_call(
        _layer_propagate_kernel,
        out_shape=(jax.ShapeDtypeStruct((n_pad, d_pad), jnp.bfloat16),  # x^(l+1)
                   jax.ShapeDtypeStruct((n_pad, d_pad), jnp.float32)),  # out
        grid=grid,
        in_specs=[
            pl.BlockSpec(memory_space=pltpu.MemorySpace.SMEM),       # alpha_l
            pl.BlockSpec((tile_m, tile_k), lambda i, k: (i, k)),     # A tile
            pl.BlockSpec((tile_k, d_pad), lambda i, k: (k, 0)),      # x^(l)
            pl.BlockSpec((tile_m, d_pad), lambda i, k: (i, 0)),      # out (in)
        ],
        out_specs=(pl.BlockSpec((tile_m, d_pad), lambda i, k: (i, 0)),
                   pl.BlockSpec((tile_m, d_pad), lambda i, k: (i, 0))),
        scratch_shapes=[pltpu.VMEM((tile_m, d_pad), jnp.float32)],
        # Alias the out accumulator in place (input 3 -> output 1): no fresh
        # HBM buffer per layer.
        input_output_aliases={3: 1},
        compiler_params=pltpu.CompilerParams(
            dimension_semantics=("parallel", "arbitrary"),
            vmem_limit_bytes=vmem_limit),
        cost_estimate=cost,
    )

    x = x0p.astype(jnp.bfloat16)
    out = alpha[0] * x0p
    for l in range(num_layers):
        x, out = call(alpha[l + 1:l + 2], Ap, x, out)
    return out


# ----------------------------------------------------------------------------
# Wrappers
# ----------------------------------------------------------------------------
def lightgcn_get_embedding(X, W, b, A_norm, alpha, num_layers, *,
                           tile_m=512, tile_k=512, force_streaming=False):
    """Alpha-weighted multi-layer node embeddings, shape [N, D] (float32)."""
    N = X.shape[0]
    D = W.shape[1]
    d_pad = _round_up(D, _LANE)

    # Clamp tiles to the problem size, keep them lane/sublane aligned.
    tile_m = max(_LANE, min(_round_up(tile_m, _LANE), _round_up(N, _LANE)))
    tile_k = max(_LANE, min(_round_up(tile_k, _LANE), _round_up(N, _LANE)))
    n_pad = _round_up(N, (tile_m * tile_k) // math.gcd(tile_m, tile_k))

    vmem_limit = _vmem_budget_bytes()

    # --- embedding layer: plain XLA (tiny, K=num_feat underfeeds the MXU) ---
    x0 = jnp.dot(X.astype(jnp.float32), W.astype(jnp.float32),
                 preferred_element_type=jnp.float32)
    x0 = x0 + b.astype(jnp.float32).reshape(1, -1)
    # Zero-pad (this also masks the bias on padded rows -> padded x^(0) == 0).
    x0p = jnp.zeros((n_pad, d_pad), jnp.float32).at[:N, :D].set(x0)

    # --- normalized adjacency, bf16 (MXU-native, halves the HBM stream) -----
    Ap = jnp.zeros((n_pad, n_pad), jnp.bfloat16).at[:N, :N].set(
        A_norm.astype(jnp.bfloat16))
    alpha = alpha.astype(jnp.float32).reshape(-1)

    if num_layers == 0:
        return (alpha[0] * x0p)[:N, :D]

    # Conservative VMEM footprint of the fused variant (double-buffered A,
    # f32 x0/out blocks, bf16 ping-pong, f32 reduction accumulator).
    fused_vmem = (2 * tile_m * tile_k * 2
                  + 2 * n_pad * d_pad * 4
                  + 2 * n_pad * d_pad * 4
                  + 2 * n_pad * d_pad * 2
                  + tile_m * d_pad * 4)
    use_fused = (not force_streaming) and fused_vmem <= vmem_limit

    if use_fused:
        out = _propagate_fused(Ap, x0p, alpha, num_layers,
                               tile_m=tile_m, tile_k=tile_k,
                               n_pad=n_pad, d_pad=d_pad,
                               vmem_limit=vmem_limit)
    else:
        out = _propagate_streaming(Ap, x0p, alpha, num_layers,
                                   tile_m=tile_m, tile_k=tile_k,
                                   n_pad=n_pad, d_pad=d_pad,
                                   vmem_limit=vmem_limit)
    return out[:N, :D]


def lightgcn_forward(edge_index, X, W, b, A_norm, alpha, num_layers,
                     edge_label_index=None, **kwargs):
    """Equivalent of LightGCN.forward: cat([out[src], out[dst]], dim=1)."""
    if edge_label_index is None:
        edge_label_index = edge_index
    out = lightgcn_get_embedding(X, W, b, A_norm, alpha, num_layers, **kwargs)
    out_src = out[edge_label_index[0]]
    out_dst = out[edge_label_index[1]]
    return jnp.concatenate([out_src, out_dst], axis=1)


def build_normalized_adjacency(edge_index, num_node):
    """Dense symmetric-normalized adjacency (LGConv / gcn_norm, no self-loops)."""
    src, dst = edge_index[0], edge_index[1]
    A = jnp.zeros((num_node, num_node), jnp.float32).at[dst, src].add(1.0)
    deg = A.sum(axis=1)
    dinv = jnp.where(deg > 0.0, 1.0 / jnp.sqrt(deg), 0.0)
    return A * dinv[:, None] * dinv[None, :]


# ----------------------------------------------------------------------------
# Demo / self-test
# ----------------------------------------------------------------------------
if __name__ == "__main__":
    num_node = 256
    num_feat = 32
    embedding_dim = 32
    num_layers = 2
    num_raw_edges = 64

    key = jax.random.PRNGKey(0)
    k_x, k_w, k_b, k_src, k_dst = jax.random.split(key, 5)

    X = jax.random.normal(k_x, (num_node, num_feat), jnp.float32)

    xav = (6.0 / (num_feat + embedding_dim)) ** 0.5
    W = jax.random.uniform(k_w, (num_feat, embedding_dim), jnp.float32, -xav, xav)
    b_bound = 1.0 / (num_feat ** 0.5)
    b = jax.random.uniform(k_b, (1, embedding_dim), jnp.float32, -b_bound, b_bound)

    alpha = jnp.full((num_layers + 1,), 1.0 / (num_layers + 1), jnp.float32)

    # Random symmetrized graph.
    src = jax.random.randint(k_src, (num_raw_edges,), 0, num_node)
    dst = jax.random.randint(k_dst, (num_raw_edges,), 0, num_node)
    edge_index = jnp.stack(
        [jnp.concatenate([src, dst]), jnp.concatenate([dst, src])]
    ).astype(jnp.int32)

    A_norm = build_normalized_adjacency(edge_index, num_node)

    # Pure-JAX reference, precision-matched to the kernels (bf16 A / x in the
    # propagation matmuls, f32 accumulation everywhere).
    x0_r = jnp.dot(X, W, preferred_element_type=jnp.float32) + b
    out_r = alpha[0] * x0_r
    A_bf = A_norm.astype(jnp.bfloat16)
    x_bf = x0_r.astype(jnp.bfloat16)
    for l in range(num_layers):
        x_f = jnp.dot(A_bf, x_bf, preferred_element_type=jnp.float32)
        out_r = out_r + alpha[l + 1] * x_f
        x_bf = x_f.astype(jnp.bfloat16)
    ref = jnp.concatenate([out_r[edge_index[0]], out_r[edge_index[1]]], axis=1)

    configs = [
        ("fused-auto-tile", {}),
        ("fused-128-tile", dict(tile_m=128, tile_k=128)),
        ("streaming-128-tile", dict(tile_m=128, tile_k=128,
                                    force_streaming=True)),
    ]
    for name, kw in configs:
        fwd = jax.jit(functools.partial(lightgcn_forward,
                                        num_layers=num_layers, **kw))
        result = jax.block_until_ready(fwd(edge_index, X, W, b, A_norm, alpha))
        assert result.shape == (2 * num_raw_edges, 2 * embedding_dim), name
        assert jnp.allclose(result, ref, atol=1e-4, rtol=1e-4), name

    print("KERNEL_OK")
</pallas_src>

<mosaic_0001>
module attributes {stable_mosaic.version = 11 : i64} {
  func.func @_fused_propagate_kernel(%arg0: i32, %arg1: i32, %arg2: i32, %arg3: memref<3xf32, #tpu.memory_space<smem>>, %arg4: memref<256x256xbf16, #tpu.memory_space<vmem>>, %arg5: memref<256x128xf32, #tpu.memory_space<vmem>>, %arg6: memref<256x128xf32, #tpu.memory_space<vmem>>, %arg7: memref<512x128xbf16, #tpu.memory_space<vmem>>, %arg8: memref<256x128xf32, #tpu.memory_space<vmem>>) attributes {dimension_semantics = [#tpu.dimension_semantics<arbitrary>, #tpu.dimension_semantics<arbitrary>, #tpu.dimension_semantics<arbitrary>], iteration_bounds = array<i64: 2, 1, 1>, scalar_prefetch = 0 : i64, scratch_operands = 2 : i64, tpu.core_type = #tpu.core_type<tc>, window_params = [{transform_indices = @transform_0, window_bounds = array<i64: 3>}, {transform_indices = @transform_1, window_bounds = array<i64: 256, 256>}, {pipeline_mode = #tpu.pipeline_mode<synchronous>, transform_indices = @transform_2, window_bounds = array<i64: 256, 128>}, {pipeline_mode = #tpu.pipeline_mode<synchronous>, transform_indices = @transform_3, window_bounds = array<i64: 256, 128>}]} {
    %c0_i32 = arith.constant 0 : i32
    %0 = arith.cmpi eq, %arg0, %c0_i32 : i32
    %c0_i32_0 = arith.constant 0 : i32
    %1 = arith.cmpi eq, %arg1, %c0_i32_0 : i32
    %2 = arith.andi %0, %1 : i1
    %c0_i32_1 = arith.constant 0 : i32
    %3 = arith.cmpi eq, %arg2, %c0_i32_1 : i32
    %4 = arith.andi %2, %3 : i1
    %5 = arith.extui %4 : i1 to i32
    %c0_i32_2 = arith.constant 0 : i32
    %6 = arith.cmpi ne, %5, %c0_i32_2 : i32
    scf.if %6 {
      %c0_16 = arith.constant 0 : index
      %c0_17 = arith.constant 0 : index
      %34 = vector.load %arg5[%c0_16, %c0_17] : memref<256x128xf32, #tpu.memory_space<vmem>>, vector<256x128xf32>
      %35 = arith.truncf %34 : vector<256x128xf32> to vector<256x128xbf16>
      %c0_18 = arith.constant 0 : index
      %c0_19 = arith.constant 0 : index
      %36 = vector.load %arg7[%c0_18, %c0_19] : memref<512x128xbf16, #tpu.memory_space<vmem>>, vector<256x128xbf16>
      tpu.vector_store %arg7[%c0_18, %c0_19], %35 {strides = array<i32>} : memref<512x128xbf16, #tpu.memory_space<vmem>>, vector<256x128xbf16>,
      %c0_20 = arith.constant 0 : index
      %37 = memref.load %arg3[%c0_20] : memref<3xf32, #tpu.memory_space<smem>>
      %38 = vector.broadcast %37 : f32 to vector<256x128xf32>
      %39 = arith.mulf %38, %34 : vector<256x128xf32>
      %c0_21 = arith.constant 0 : index
      %c0_22 = arith.constant 0 : index
      %40 = vector.load %arg6[%c0_21, %c0_22] : memref<256x128xf32, #tpu.memory_space<vmem>>, vector<256x128xf32>
      tpu.vector_store %arg6[%c0_21, %c0_22], %39 {strides = array<i32>} : memref<256x128xf32, #tpu.memory_space<vmem>>, vector<256x128xf32>,
    } else {
    }
    %c2_i32 = arith.constant 2 : i32
    %c0_i32_3 = arith.constant 0 : i32
    %7 = arith.cmpi eq, %c2_i32, %c0_i32_3 : i32
    %c1_i32 = arith.constant 1 : i32
    %8 = arith.select %7, %c1_i32, %c2_i32 : i32
    %9 = arith.remsi %arg0, %8 : i32
    %c0_i32_4 = arith.constant 0 : i32
    %10 = arith.cmpi ne, %9, %c0_i32_4 : i32
    %c0_i32_5 = arith.constant 0 : i32
    %11 = arith.cmpi slt, %9, %c0_i32_5 : i32
    %c0_i32_6 = arith.constant 0 : i32
    %12 = arith.cmpi slt, %8, %c0_i32_6 : i32
    %13 = arith.xori %11, %12 : i1
    %14 = arith.andi %13, %10 : i1
    %15 = arith.addi %9, %8 : i32
    %16 = arith.select %14, %15, %9 : i32
    %c256_i32 = arith.constant 256 : i32
    %17 = arith.muli %16, %c256_i32 : i32
    %c256_i32_7 = arith.constant 256 : i32
    %18 = arith.muli %arg2, %c256_i32_7 : i32
    %19 = arith.addi %17, %18 : i32
    %20 = tpu.assume_multiple %19, 128 : i32
    %c0 = arith.constant 0 : index
    %c0_8 = arith.constant 0 : index
    %21 = vector.load %arg4[%c0, %c0_8] : memref<256x256xbf16, #tpu.memory_space<vmem>>, vector<256x256xbf16>
    %22 = arith.index_cast %20 : i32 to index
    %c0_9 = arith.constant 0 : index
    %23 = vector.load %arg7[%22, %c0_9] : memref<512x128xbf16, #tpu.memory_space<vmem>>, vector<256x128xbf16>
    %cst = arith.constant dense<0.000000e+00> : vector<256x128xf32>
    %24 = tpu.matmul %21, %23, %cst {dimension_numbers = #tpu.dot_dimension_numbers<[1], [0], [0], [1], [0, 0, 1, 1], [], []>} : vector<256x256xbf16>, vector<256x128xbf16>, vector<256x128xf32> -> vector<256x128xf32>
    %c0_i32_10 = arith.constant 0 : i32
    %25 = arith.cmpi eq, %arg2, %c0_i32_10 : i32
    %26 = arith.extui %25 : i1 to i32
    %c0_i32_11 = arith.constant 0 : i32
    %27 = arith.cmpi ne, %26, %c0_i32_11 : i32
    scf.if %27 {
      %c0_16 = arith.constant 0 : index
      %c0_17 = arith.constant 0 : index
      %34 = vector.load %arg8[%c0_16, %c0_17] : memref<256x128xf32, #tpu.memory_space<vmem>>, vector<256x128xf32>
      tpu.vector_store %arg8[%c0_16, %c0_17], %24 {strides = array<i32>} : memref<256x128xf32, #tpu.memory_space<vmem>>, vector<256x128xf32>,
    } else {
    }
    %c0_i32_12 = arith.constant 0 : i32
    %28 = arith.cmpi ne, %arg2, %c0_i32_12 : i32
    %29 = arith.extui %28 : i1 to i32
    %c0_i32_13 = arith.constant 0 : i32
    %30 = arith.cmpi ne, %29, %c0_i32_13 : i32
    scf.if %30 {
      %c0_16 = arith.constant 0 : index
      %c0_17 = arith.constant 0 : index
      %34 = vector.load %arg8[%c0_16, %c0_17] : memref<256x128xf32, #tpu.memory_space<vmem>>, vector<256x128xf32>
      %35 = arith.addf %34, %24 : vector<256x128xf32>
      %c0_18 = arith.constant 0 : index
      %c0_19 = arith.constant 0 : index
      %36 = vector.load %arg8[%c0_18, %c0_19] : memref<256x128xf32, #tpu.memory_space<vmem>>, vector<256x128xf32>
      tpu.vector_store %arg8[%c0_18, %c0_19], %35 {strides = array<i32>} : memref<256x128xf32, #tpu.memory_space<vmem>>, vector<256x128xf32>,
    } else {
    }
    %c0_i32_14 = arith.constant 0 : i32
    %31 = arith.cmpi eq, %arg2, %c0_i32_14 : i32
    %32 = arith.extui %31 : i1 to i32
    %c0_i32_15 = arith.constant 0 : i32
    %33 = arith.cmpi ne, %32, %c0_i32_15 : i32
    scf.if %33 {
      %c0_16 = arith.constant 0 : index
      %c0_17 = arith.constant 0 : index
      %34 = vector.load %arg8[%c0_16, %c0_17] : memref<256x128xf32, #tpu.memory_space<vmem>>, vector<256x128xf32>
      %c1_i32_18 = arith.constant 1 : i32
      %35 = arith.subi %c1_i32_18, %16 : i32
      %c256_i32_19 = arith.constant 256 : i32
      %36 = arith.muli %35, %c256_i32_19 : i32
      %c256_i32_20 = arith.constant 256 : i32
      %37 = arith.muli %arg1, %c256_i32_20 : i32
      %38 = arith.addi %36, %37 : i32
      %39 = tpu.assume_multiple %38, 128 : i32
      %40 = arith.truncf %34 : vector<256x128xf32> to vector<256x128xbf16>
      %41 = arith.index_cast %39 : i32 to index
      %c0_21 = arith.constant 0 : index
      %42 = vector.load %arg7[%41, %c0_21] : memref<512x128xbf16, #tpu.memory_space<vmem>>, vector<256x128xbf16>
      tpu.vector_store %arg7[%41, %c0_21], %40 {strides = array<i32>} : memref<512x128xbf16, #tpu.memory_space<vmem>>, vector<256x128xbf16>,
      %c256_i32_22 = arith.constant 256 : i32
      %43 = arith.muli %arg1, %c256_i32_22 : i32
      %44 = tpu.assume_multiple %43, 128 : i32
      %45 = arith.index_cast %44 : i32 to index
      %c0_23 = arith.constant 0 : index
      %46 = vector.load %arg6[%45, %c0_23] : memref<256x128xf32, #tpu.memory_space<vmem>>, vector<256x128xf32>
      %c1_i32_24 = arith.constant 1 : i32
      %47 = arith.addi %arg0, %c1_i32_24 : i32
      %48 = arith.index_cast %47 : i32 to index
      %49 = memref.load %arg3[%48] : memref<3xf32, #tpu.memory_space<smem>>
      %50 = vector.broadcast %49 : f32 to vector<256x128xf32>
      %51 = arith.mulf %50, %34 : vector<256x128xf32>
      %52 = arith.addf %46, %51 : vector<256x128xf32>
      %53 = arith.index_cast %44 : i32 to index
      %c0_25 = arith.constant 0 : index
      %54 = vector.load %arg6[%53, %c0_25] : memref<256x128xf32, #tpu.memory_space<vmem>>, vector<256x128xf32>
      tpu.vector_store %arg6[%53, %c0_25], %52 {strides = array<i32>} : memref<256x128xf32, #tpu.memory_space<vmem>>, vector<256x128xf32>,
    } else {
    }
    return
  }
  func.func @transform_0(%arg0: i32, %arg1: i32, %arg2: i32) -> i32 {
    %c0_i32 = arith.constant 0 : i32
    %c0_i32_0 = arith.constant 0 : i32
    return %c0_i32 : i32
  }
  func.func @transform_1(%arg0: i32, %arg1: i32, %arg2: i32) -> (i32, i32) {
    %c0_i32 = arith.constant 0 : i32
    return %arg1, %arg2 : i32, i32
  }
  func.func @transform_2(%arg0: i32, %arg1: i32, %arg2: i32) -> (i32, i32) {
    %c0_i32 = arith.constant 0 : i32
    %c0_i32_0 = arith.constant 0 : i32
    %c0_i32_1 = arith.constant 0 : i32
    return %c0_i32, %c0_i32_0 : i32, i32
  }
  func.func @transform_3(%arg0: i32, %arg1: i32, %arg2: i32) -> (i32, i32) {
    %c0_i32 = arith.constant 0 : i32
    %c0_i32_0 = arith.constant 0 : i32
    %c0_i32_1 = arith.constant 0 : i32
    return %c0_i32, %c0_i32_0 : i32, i32
  }
}

</mosaic_0001>

<llo_original>
// kernel: lightgcn_forward.1
$region0: #{lightgcn_forward.1}
  #allocation0 [shape = 'u32[]', space=smem, size = 0x4, offset = 0x4, fixed_abs, tag = 'smem constant byte address 0x4 - core index']
  #allocation1 [shape = 'u32[144,128]{1,0:T(1,128)}', space=vmem, size = 0x12000, scoped, tag = 'internal scratch']
  #allocation2 [shape = 'bf16[512,128]{1,0:T(16,128)(2,1)}', space=vmem, size = 0x20000, scoped, tag = 'scratch operand']
  #allocation3 [shape = 'f32[256,128]{1,0:T(8,128)}', space=vmem, size = 0x20000, scoped, tag = 'scratch operand']
  %s0 = inlined_call_operand.vmem [shape: f32[3], index: 0, kind: input, shape index: {}]
  %s1 = inlined_call_operand.vmem [shape: bf16[256,256], index: 1, kind: input, shape index: {}]
  %s2 = inlined_call_operand.vmem [shape: f32[256,128], index: 2, kind: input, shape index: {}]
  %s3 = inlined_call_operand.vmem [shape: f32[256,128], index: 3, kind: output, shape index: {}]
  %s4 = sld [smem:[#allocation0]]
  $region65: #{lightgcn_forward.1} parent=0
    _
  %s6 = ssub.s32 1, %s4
  %s7 = scalar_select 0, %s6, %s4
  $region1: #{lightgcn_forward.1} parent=0
    #allocation4 [shape = 'u8[512]{0}', space=smem, size = 0x200, scoped, tag = 'input window, operand 0, single buffered']
    #allocation5 [shape = 's32[2]{0}', space=sflag, size = 0x8, scoped, tag = 'scoped memory for lightgcn_forward.1']
    %8 = vsyncpa [#allocation5], 0
    loop: start=0, step=1, limit=4
    $region2: #{lightgcn_forward.1} parent=1 // loop_pre_header
      _
    $region3: #{lightgcn_forward.1} parent=1 // loop_header
      %s10 = sphi 0, %s14
      %p11 = scmp.ge.s32.totalorder %s10, 4
      %s17 = sphi 0, %s36
      %s18 = sphi 0, %s32
      %s19 = sphi 0, %s28
      %s20 = sphi 0, %s17
      %s21 = sphi 0, %s18
      %s22 = sphi 0, %s19
      %s23 = sphi 0, %s20
      %s24 = sphi 0, %s21
      %s25 = sphi 0, %s22
      %s37 = sphi 0, %s37
      %s39 = sphi 0, %s37
      %s40 = sphi 0, %s39
      %s54 = sphi 0, %s40
      %s62 = sphi 0, %s64
      %s65 = sphi 0, %s62
      %s66 = sphi 0, %s65
      %s82 = sphi 0, %s66
      %s86 = sphi 0, %s86
      %s88 = sphi 0, %s86
      %s89 = sphi 0, %s88
      %s103 = sphi 0, %s89
      %s107 = sphi 0, %s107
      %s109 = sphi 0, %s107
      %s110 = sphi 0, %s109
      %s124 = sphi 0, %s110
    $region4: #{lightgcn_forward.1} parent=1 // loop_header_branch
      %13 = sbr.rel (%p11) target = $region8
    $region5: #{lightgcn_forward.1} parent=1 // loop_body
      %s15 = ssub.s32 %s10, 1
      %s16 = ssub.s32 %s10, 2
      %s26 = sadd.s32 1, %s19
      %p27 = scmp.ge.s32.totalorder %s26, 1
      %s28 = scalar_select %p27, 0, %s26
      %s29 = sadd.s32 1, %s18
      %s30 = scalar_select %p27, %s29, %s18
      %p31 = scmp.ge.s32.totalorder %s30, 1
      %s32 = scalar_select %p31, 0, %s30
      %s33 = sadd.s32 1, %s17
      %s34 = scalar_select %p31, %s33, %s17
      %p35 = scmp.ge.s32.totalorder %s34, 2
      %s36 = scalar_select %p35, 0, %s34
      %s38 = sadd.s32 %s37, 1
      %p41 = scmp.eq.s32.totalorder %s10, 1
      %p42 = scmp.ne.s32.totalorder %s37, %s39
      %p43 = scmp.eq.s32.totalorder %s10, 0
      %p44 = por %p42, %p43
      %p45 = scmp.ne.s32.totalorder %s37, %s39
      %p46 = scmp.eq.s32.totalorder %s15, 1
      %p47 = por %p45, %p46
      %p48 = scmp.ne.s32.totalorder %s39, %s40
      %p49 = scmp.eq.s32.totalorder %s15, 0
      %p50 = por %p48, %p49
      %p51 = scmp.ne.s32.totalorder %s39, %s40
      %p52 = scmp.eq.s32.totalorder %s16, 1
      %p53 = por %p51, %p52
      %p55 = scmp.ne.s32.totalorder %s40, %s54
      %p56 = scmp.eq.s32.totalorder %s16, 0
      %p57 = por %p55, %p56
      %s58 = ssub.s32 %s18, %s32
      %s59 = ssub.s32 %s19, %s28
      %s60 = sor.u32 %s58, %s59
      %p61 = scmp.eq.s32.totalorder %s60, 0
      %s63 = sadd.s32 %s62, 1
      %s64 = scalar_select %p61, %s62, %s63
      %p67 = pneg %p61
      %p68 = scmp.eq.s32.totalorder %s10, 1
      %p69 = por %p67, %p68
      %p70 = scmp.ne.s32.totalorder %s62, %s65
      %p71 = scmp.eq.s32.totalorder %s10, 0
      %p72 = por %p70, %p71
      %p73 = scmp.ne.s32.totalorder %s62, %s65
      %p74 = scmp.eq.s32.totalorder %s15, 1
      %p75 = por %p73, %p74
      %p76 = scmp.ne.s32.totalorder %s65, %s66
      %p77 = scmp.eq.s32.totalorder %s15, 0
      %p78 = por %p76, %p77
      %p79 = scmp.ne.s32.totalorder %s65, %s66
      %p80 = scmp.eq.s32.totalorder %s16, 1
      %p81 = por %p79, %p80
      %p83 = scmp.ne.s32.totalorder %s66, %s82
      %p84 = scmp.eq.s32.totalorder %s16, 0
      %p85 = por %p83, %p84
      %s87 = sadd.s32 %s86, 1
      %p90 = scmp.eq.s32.totalorder %s10, 1
      %p91 = scmp.ne.s32.totalorder %s86, %s88
      %p92 = scmp.eq.s32.totalorder %s10, 0
      %p93 = por %p91, %p92
      %p94 = scmp.ne.s32.totalorder %s86, %s88
      %p95 = scmp.eq.s32.totalorder %s15, 1
      %p96 = por %p94, %p95
      %p97 = scmp.ne.s32.totalorder %s88, %s89
      %p98 = scmp.eq.s32.totalorder %s15, 0
      %p99 = por %p97, %p98
      %p100 = scmp.ne.s32.totalorder %s88, %s89
      %p101 = scmp.eq.s32.totalorder %s16, 1
      %p102 = por %p100, %p101
      %p104 = scmp.ne.s32.totalorder %s89, %s103
      %p105 = scmp.eq.s32.totalorder %s16, 0
      %p106 = por %p104, %p105
      %s108 = sadd.s32 %s107, 1
      %p111 = scmp.eq.s32.totalorder %s10, 1
      %p112 = scmp.ne.s32.totalorder %s107, %s109
      %p113 = scmp.eq.s32.totalorder %s10, 0
      %p114 = por %p112, %p113
      %p115 = scmp.ne.s32.totalorder %s107, %s109
      %p116 = scmp.eq.s32.totalorder %s15, 1
      %p117 = por %p115, %p116
      %p118 = scmp.ne.s32.totalorder %s109, %s110
      %p119 = scmp.eq.s32.totalorder %s15, 0
      %p120 = por %p118, %p119
      %p121 = scmp.ne.s32.totalorder %s109, %s110
      %p122 = scmp.eq.s32.totalorder %s16, 1
      %p123 = por %p121, %p122
      %p125 = scmp.ne.s32.totalorder %s110, %s124
      %p126 = scmp.eq.s32.totalorder %s16, 0
      %p127 = por %p125, %p126
      %p128 = scmp.le.s32.totalorder 1, %s10
      %p129 = scmp.lt.s32.totalorder %s10, 3
      %p130 = pnand %p128, %p129
      %p131 = pneg %p130
      // Predicated region
      $region9: #{lightgcn_forward.1} parent=5 // pred_check
        _
      $region10: #{lightgcn_forward.1} parent=5 // pred_check_branch
        %133 = sbr.rel (%p130) target = $region12
      $region11: #{lightgcn_forward.1} parent=5 // pred_region
        %s134 = ssub.s32 %s10, 1
        // Predicated region
        $region13: #{lightgcn_forward.1} parent=11 // pred_check
          %p135 = pneg %p50
        $region14: #{lightgcn_forward.1} parent=11 // pred_check_branch
          %137 = sbr.rel (%p135) target = $region16
        $region15: #{lightgcn_forward.1} parent=11 // pred_region
          %s139 = ssub.s32 16, 16
          %140 = vsyncadd [#allocation5], %s139
          %s142 = sshll.u32 %s0, 4
          %s143 = int_to_ptr.vmem [resolvable:$true] %s142
          %145 = dma.vmem_to_smem %s143, 16, [#allocation4], [#allocation5]
        $region16: #{lightgcn_forward.1} parent=11 // pred_fallthru
          _
        // Predicated region
        $region17: #{lightgcn_forward.1} parent=11 // pred_check
          %p146 = pneg %p78
        $region18: #{lightgcn_forward.1} parent=11 // pred_check_branch
          %148 = sbr.rel (%p146) target = $region20
        $region19: #{lightgcn_forward.1} parent=11 // pred_region
          %s149 = smul.u32 32, %s21
          %s150 = smul.u32 2, %s22
          %p151 = scmp.lt.s32.totalorder %s149, 31
          %s152 = scalar_select %p151, %s149, 31
          %p153 = scmp.lt.s32.totalorder %s150, 1
          %s154 = scalar_select %p153, %s150, 1
          %s155 = smul.addr %s152, 2
          %s156 = sadd.s32 %s154, %s155
          %s157 = smul.addr %s156, 4
          %s158 = scalar_lea.vmem %s1, %s157
          %s159 = smul.u32 32, %s21
          %s160 = smul.u32 2, %s22
        $region20: #{lightgcn_forward.1} parent=11 // pred_fallthru
          _
        // Predicated region
        $region21: #{lightgcn_forward.1} parent=11 // pred_check
          %p161 = pneg %p99
        $region22: #{lightgcn_forward.1} parent=11 // pred_check_branch
          %163 = sbr.rel (%p161) target = $region24
        $region23: #{lightgcn_forward.1} parent=11 // pred_region
          _
        $region24: #{lightgcn_forward.1} parent=11 // pred_fallthru
          _
      $region12: #{lightgcn_forward.1} parent=5 // pred_fallthru
        _
      %p164 = scmp.lt.s32.totalorder %s10, 2
      // Predicated region
      $region25: #{lightgcn_forward.1} parent=5 // pred_check
        %p165 = pneg %p164
      $region26: #{lightgcn_forward.1} parent=5 // pred_check_branch
        %167 = sbr.rel (%p165) target = $region28
      $region27: #{lightgcn_forward.1} parent=5 // pred_region
        _
      $region28: #{lightgcn_forward.1} parent=5 // pred_fallthru
        _
      %p168 = scmp.le.s32.totalorder 1, %s10
      %p169 = scmp.lt.s32.totalorder %s10, 3
      %p170 = pnand %p168, %p169
      %p171 = pneg %p170
      // Predicated region
      $region29: #{lightgcn_forward.1} parent=5 // pred_check
        _
      $region30: #{lightgcn_forward.1} parent=5 // pred_check_branch
        %173 = sbr.rel (%p170) target = $region32
      $region31: #{lightgcn_forward.1} parent=5 // pred_region
        %s174 = ssub.s32 %s10, 1
        // Predicated region
        $region33: #{lightgcn_forward.1} parent=31 // pred_check
          %p175 = pneg %p50
        $region34: #{lightgcn_forward.1} parent=31 // pred_check_branch
          %177 = sbr.rel (%p175) target = $region36
        $region35: #{lightgcn_forward.1} parent=31 // pred_region
          %178 = dma.done [#allocation5], 16
        $region36: #{lightgcn_forward.1} parent=31 // pred_fallthru
          _
        %179 = sfence
        %p180 = pneg %p50
        %p181 = pneg %p47
        %s182 = smul.u32 32, %s21
        %s183 = smul.u32 2, %s22
        %p184 = scmp.lt.s32.totalorder %s182, 31
        %s185 = scalar_select %p184, %s182, 31
        %p186 = scmp.lt.s32.totalorder %s183, 1
        %s187 = scalar_select %p186, %s183, 1
        %s188 = smul.addr %s185, 2
        %s189 = sadd.s32 %s187, %s188
        %s190 = smul.addr %s189, 4
        %s191 = scalar_lea.vmem %s1, %s190
        %p192 = pneg %p78
        %p193 = pneg %p75
        %p194 = pneg %p99
        %p195 = pneg %p96
        %p196 = pneg %p120
        %p197 = pneg %p117
        %s198 = smul.u32 32, %s21
        %s199 = smul.u32 2, %s22
        %p200 = scmp.lt.s32.totalorder %s198, 31
        %s201 = scalar_select %p200, %s198, 31
        %p202 = scmp.lt.s32.totalorder %s199, 1
        %s203 = scalar_select %p202, %s199, 1
        %s204 = smul.addr %s201, 2
        %s205 = sadd.s32 %s203, %s204
        %s206 = smul.addr %s205, 4
        %s207 = scalar_lea.vmem %s1, %s206
        %s208 = smul.u32 32, %s21
        %s209 = smul.u32 2, %s22
        %p211 = scmp.eq.s32.totalorder %s20, 0
        %p212 = scmp.eq.s32.totalorder %s21, 0
        %p213 = pnand %p211, %p212
        %p214 = pneg %p213
        %p215 = scmp.eq.s32.totalorder %s22, 0
        %p216 = pnand %p214, %p215
        %p217 = pneg %p216
        // Predicated region
        $region37: #{lightgcn_forward.1} parent=31 // pred_check
          _
        $region38: #{lightgcn_forward.1} parent=31 // pred_check_branch
          %219 = sbr.rel (%p216) target = $region40
        $region39: #{lightgcn_forward.1} parent=31 // pred_region
          %v220 = vld [vmem:[%s2] sm:$0xff]
          %v221 = vld [vmem:[%s2 + $0x8] sm:$0xff]
          %v222 = vld [vmem:[%s2 + $0x10] sm:$0xff]
          %v223 = vld [vmem:[%s2 + $0x18] sm:$0xff]
          %v224 = vld [vmem:[%s2 + $0x20] sm:$0xff]
          %v225 = vld [vmem:[%s2 + $0x28] sm:$0xff]
          %v226 = vld [vmem:[%s2 + $0x30] sm:$0xff]
          %v227 = vld [vmem:[%s2 + $0x38] sm:$0xff]
          %v228 = vld [vmem:[%s2 + $0x40] sm:$0xff]
          %v229 = vld [vmem:[%s2 + $0x48] sm:$0xff]
          %v230 = vld [vmem:[%s2 + $0x50] sm:$0xff]
          %v231 = vld [vmem:[%s2 + $0x58] sm:$0xff]
          %v232 = vld [vmem:[%s2 + $0x60] sm:$0xff]
          %v233 = vld [vmem:[%s2 + $0x68] sm:$0xff]
          %v234 = vld [vmem:[%s2 + $0x70] sm:$0xff]
          %v235 = vld [vmem:[%s2 + $0x78] sm:$0xff]
          %v236 = vld [vmem:[%s2 + $0x80] sm:$0xff]
          %v237 = vld [vmem:[%s2 + $0x88] sm:$0xff]
          %v238 = vld [vmem:[%s2 + $0x90] sm:$0xff]
          %v239 = vld [vmem:[%s2 + $0x98] sm:$0xff]
          %v240 = vld [vmem:[%s2 + $0xa0] sm:$0xff]
          %v241 = vld [vmem:[%s2 + $0xa8] sm:$0xff]
          %v242 = vld [vmem:[%s2 + $0xb0] sm:$0xff]
          %v243 = vld [vmem:[%s2 + $0xb8] sm:$0xff]
          %v244 = vld [vmem:[%s2 + $0xc0] sm:$0xff]
          %v245 = vld [vmem:[%s2 + $0xc8] sm:$0xff]
          %v246 = vld [vmem:[%s2 + $0xd0] sm:$0xff]
          %v247 = vld [vmem:[%s2 + $0xd8] sm:$0xff]
          %v248 = vld [vmem:[%s2 + $0xe0] sm:$0xff]
          %v249 = vld [vmem:[%s2 + $0xe8] sm:$0xff]
          %v250 = vld [vmem:[%s2 + $0xf0] sm:$0xff]
          %v251 = vld [vmem:[%s2 + $0xf8] sm:$0xff]
          %v252 = vpack.c.bf16 %v221, %v220
          %v253 = vpack.c.bf16 %v223, %v222
          %v254 = vpack.c.bf16 %v225, %v224
          %v255 = vpack.c.bf16 %v227, %v226
          %v256 = vpack.c.bf16 %v229, %v228
          %v257 = vpack.c.bf16 %v231, %v230
          %v258 = vpack.c.bf16 %v233, %v232
          %v259 = vpack.c.bf16 %v235, %v234
          %v260 = vpack.c.bf16 %v237, %v236
          %v261 = vpack.c.bf16 %v239, %v238
          %v262 = vpack.c.bf16 %v241, %v240
          %v263 = vpack.c.bf16 %v243, %v242
          %v264 = vpack.c.bf16 %v245, %v244
          %v265 = vpack.c.bf16 %v247, %v246
          %v266 = vpack.c.bf16 %v249, %v248
          %v267 = vpack.c.bf16 %v251, %v250
          %268 = vst [vmem:[#allocation2] sm:$0xff] %v252
          %269 = vst [vmem:[#allocation2 + $0x8] sm:$0xff] %v253
          %270 = vst [vmem:[#allocation2 + $0x10] sm:$0xff] %v254
          %271 = vst [vmem:[#allocation2 + $0x18] sm:$0xff] %v255
          %272 = vst [vmem:[#allocation2 + $0x20] sm:$0xff] %v256
          %273 = vst [vmem:[#allocation2 + $0x28] sm:$0xff] %v257
          %274 = vst [vmem:[#allocation2 + $0x30] sm:$0xff] %v258
          %275 = vst [vmem:[#allocation2 + $0x38] sm:$0xff] %v259
          %276 = vst [vmem:[#allocation2 + $0x40] sm:$0xff] %v260
          %277 = vst [vmem:[#allocation2 + $0x48] sm:$0xff] %v261
          %278 = vst [vmem:[#allocation2 + $0x50] sm:$0xff] %v262
          %279 = vst [vmem:[#allocation2 + $0x58] sm:$0xff] %v263
          %280 = vst [vmem:[#allocation2 + $0x60] sm:$0xff] %v264
          %281 = vst [vmem:[#allocation2 + $0x68] sm:$0xff] %v265
          %282 = vst [vmem:[#allocation2 + $0x70] sm:$0xff] %v266
          %283 = vst [vmem:[#allocation2 + $0x78] sm:$0xff] %v267
          %s284 = sld [smem:[#allocation4]]
          %v285 = vstv %s284
          %v286 = vmul.f32 %v285, %v220
          %v287 = vmul.f32 %v285, %v221
          %v288 = vmul.f32 %v285, %v222
          %v289 = vmul.f32 %v285, %v223
          %v290 = vmul.f32 %v285, %v224
          %v291 = vmul.f32 %v285, %v225
          %v292 = vmul.f32 %v285, %v226
          %v293 = vmul.f32 %v285, %v227
          %v294 = vmul.f32 %v285, %v228
          %v295 = vmul.f32 %v285, %v229
          %v296 = vmul.f32 %v285, %v230
          %v297 = vmul.f32 %v285, %v231
          %v298 = vmul.f32 %v285, %v232
          %v299 = vmul.f32 %v285, %v233
          %v300 = vmul.f32 %v285, %v234
          %v301 = vmul.f32 %v285, %v235
          %v302 = vmul.f32 %v285, %v236
          %v303 = vmul.f32 %v285, %v237
          %v304 = vmul.f32 %v285, %v238
          %v305 = vmul.f32 %v285, %v239
          %v306 = vmul.f32 %v285, %v240
          %v307 = vmul.f32 %v285, %v241
          %v308 = vmul.f32 %v285, %v242
          %v309 = vmul.f32 %v285, %v243
          %v310 = vmul.f32 %v285, %v244
          %v311 = vmul.f32 %v285, %v245
          %v312 = vmul.f32 %v285, %v246
          %v313 = vmul.f32 %v285, %v247
          %v314 = vmul.f32 %v285, %v248
          %v315 = vmul.f32 %v285, %v249
          %v316 = vmul.f32 %v285, %v250
          %v317 = vmul.f32 %v285, %v251
          %318 = vst [vmem:[%s3] sm:$0xff] %v286
          %319 = vst [vmem:[%s3 + $0x8] sm:$0xff] %v287
          %320 = vst [vmem:[%s3 + $0x10] sm:$0xff] %v288
          %321 = vst [vmem:[%s3 + $0x18] sm:$0xff] %v289
          %322 = vst [vmem:[%s3 + $0x20] sm:$0xff] %v290
          %323 = vst [vmem:[%s3 + $0x28] sm:$0xff] %v291
          %324 = vst [vmem:[%s3 + $0x30] sm:$0xff] %v292
          %325 = vst [vmem:[%s3 + $0x38] sm:$0xff] %v293
          %326 = vst [vmem:[%s3 + $0x40] sm:$0xff] %v294
          %327 = vst [vmem:[%s3 + $0x48] sm:$0xff] %v295
          %328 = vst [vmem:[%s3 + $0x50] sm:$0xff] %v296
          %329 = vst [vmem:[%s3 + $0x58] sm:$0xff] %v297
          %330 = vst [vmem:[%s3 + $0x60] sm:$0xff] %v298
          %331 = vst [vmem:[%s3 + $0x68] sm:$0xff] %v299
          %332 = vst [vmem:[%s3 + $0x70] sm:$0xff] %v300
          %333 = vst [vmem:[%s3 + $0x78] sm:$0xff] %v301
          %334 = vst [vmem:[%s3 + $0x80] sm:$0xff] %v302
          %335 = vst [vmem:[%s3 + $0x88] sm:$0xff] %v303
          %336 = vst [vmem:[%s3 + $0x90] sm:$0xff] %v304
          %337 = vst [vmem:[%s3 + $0x98] sm:$0xff] %v305
          %338 = vst [vmem:[%s3 + $0xa0] sm:$0xff] %v306
          %339 = vst [vmem:[%s3 + $0xa8] sm:$0xff] %v307
          %340 = vst [vmem:[%s3 + $0xb0] sm:$0xff] %v308
          %341 = vst [vmem:[%s3 + $0xb8] sm:$0xff] %v309
          %342 = vst [vmem:[%s3 + $0xc0] sm:$0xff] %v310
          %343 = vst [vmem:[%s3 + $0xc8] sm:$0xff] %v311
          %344 = vst [vmem:[%s3 + $0xd0] sm:$0xff] %v312
          %345 = vst [vmem:[%s3 + $0xd8] sm:$0xff] %v313
          %346 = vst [vmem:[%s3 + $0xe0] sm:$0xff] %v314
          %347 = vst [vmem:[%s3 + $0xe8] sm:$0xff] %v315
          %348 = vst [vmem:[%s3 + $0xf0] sm:$0xff] %v316
          %349 = vst [vmem:[%s3 + $0xf8] sm:$0xff] %v317
        $region40: #{lightgcn_forward.1} parent=31 // pred_fallthru
          _
        %p350 = scmp.lt.s32.totalorder %s20, 0
        %s351 = ssub.s32 0, %s20
        %s352 = scalar_select %p350, %s351, %s20
        %s353 = sand.u32 %s352, 1
        %s354 = ssub.s32 0, %s353
        %s355 = scalar_select %p350, %s354, %s353
        %p356 = scmp.ne.s32.totalorder %s355, 0
        %p357 = scmp.lt.s32.totalorder %s355, 0
        %p358 = pnand %p357, %p356
        %p359 = pneg %p358
        %s360 = sadd.s32 %s355, 2
        %s361 = scalar_select %p359, %s360, %s355
        %s362 = smul.u32 %s361, 256
        %s363 = smul.u32 %s22, 256
        %s364 = sadd.s32 %s362, %s363
        %v365 = vld [vmem:[%s207] sm:$0xff]
        %v366 = vld [vmem:[%s207 + $0x8] sm:$0xff]
        %v367 = vld [vmem:[%s207 + $0x10] sm:$0xff]
        %v368 = vld [vmem:[%s207 + $0x18] sm:$0xff]
        %v369 = vld [vmem:[%s207 + $0x20] sm:$0xff]
        %v370 = vld [vmem:[%s207 + $0x28] sm:$0xff]
        %v371 = vld [vmem:[%s207 + $0x30] sm:$0xff]
        %v372 = vld [vmem:[%s207 + $0x38] sm:$0xff]
        %v373 = vld [vmem:[%s207 + $0x40] sm:$0xff]
        %v374 = vld [vmem:[%s207 + $0x48] sm:$0xff]
        %v375 = vld [vmem:[%s207 + $0x50] sm:$0xff]
        %v376 = vld [vmem:[%s207 + $0x58] sm:$0xff]
        %v377 = vld [vmem:[%s207 + $0x60] sm:$0xff]
        %v378 = vld [vmem:[%s207 + $0x68] sm:$0xff]
        %v379 = vld [vmem:[%s207 + $0x70] sm:$0xff]
        %v380 = vld [vmem:[%s207 + $0x78] sm:$0xff]
        %v381 = vld [vmem:[%s207 + $0x80] sm:$0xff]
        %v382 = vld [vmem:[%s207 + $0x88] sm:$0xff]
        %v383 = vld [vmem:[%s207 + $0x90] sm:$0xff]
        %v384 = vld [vmem:[%s207 + $0x98] sm:$0xff]
        %v385 = vld [vmem:[%s207 + $0xa0] sm:$0xff]
        %v386 = vld [vmem:[%s207 + $0xa8] sm:$0xff]
        %v387 = vld [vmem:[%s207 + $0xb0] sm:$0xff]
        %v388 = vld [vmem:[%s207 + $0xb8] sm:$0xff]
        %v389 = vld [vmem:[%s207 + $0xc0] sm:$0xff]
        %v390 = vld [vmem:[%s207 + $0xc8] sm:$0xff]
        %v391 = vld [vmem:[%s207 + $0xd0] sm:$0xff]
        %v392 = vld [vmem:[%s207 + $0xd8] sm:$0xff]
        %v393 = vld [vmem:[%s207 + $0xe0] sm:$0xff]
        %v394 = vld [vmem:[%s207 + $0xe8] sm:$0xff]
        %v395 = vld [vmem:[%s207 + $0xf0] sm:$0xff]
        %v396 = vld [vmem:[%s207 + $0xf8] sm:$0xff]
        %s397 = sshra.s32 %s364, 4
        %s398 = sand.u32 %s364, 15
        %s399 = smul.addr %s397, 8
        %s400 = scalar_lea.vmem [#allocation2], %s399
        %v401 = vld [vmem:[%s400] sm:$0xff]
        %v402 = vld [vmem:[%s400 + $0x8] sm:$0xff]
        %v403 = vld [vmem:[%s400 + $0x10] sm:$0xff]
        %v404 = vld [vmem:[%s400 + $0x18] sm:$0xff]
        %v405 = vld [vmem:[%s400 + $0x20] sm:$0xff]
        %v406 = vld [vmem:[%s400 + $0x28] sm:$0xff]
        %v407 = vld [vmem:[%s400 + $0x30] sm:$0xff]
        %v408 = vld [vmem:[%s400 + $0x38] sm:$0xff]
        %v409 = vld [vmem:[%s400 + $0x40] sm:$0xff]
        %v410 = vld [vmem:[%s400 + $0x48] sm:$0xff]
        %v411 = vld [vmem:[%s400 + $0x50] sm:$0xff]
        %v412 = vld [vmem:[%s400 + $0x58] sm:$0xff]
        %v413 = vld [vmem:[%s400 + $0x60] sm:$0xff]
        %v414 = vld [vmem:[%s400 + $0x68] sm:$0xff]
        %v415 = vld [vmem:[%s400 + $0x70] sm:$0xff]
        %v416 = vld [vmem:[%s400 + $0x78] sm:$0xff]
        %v449 = vunpack.c.l.b16 %v365
        %v450 = vunpack.c.h.b16 %v365
        %v451 = vunpack.c.l.b16 %v366
        %v452 = vunpack.c.h.b16 %v366
        %v453 = vunpack.c.l.b16 %v367
        %v454 = vunpack.c.h.b16 %v367
        %v455 = vunpack.c.l.b16 %v368
        %v456 = vunpack.c.h.b16 %v368
        %v457 = vunpack.c.l.b16 %v369
        %v458 = vunpack.c.h.b16 %v369
        %v459 = vunpack.c.l.b16 %v370
        %v460 = vunpack.c.h.b16 %v370
        %v461 = vunpack.c.l.b16 %v371
        %v462 = vunpack.c.h.b16 %v371
        %v463 = vunpack.c.l.b16 %v372
        %v464 = vunpack.c.h.b16 %v372
        %v465 = vunpack.c.l.b16 %v373
        %v466 = vunpack.c.h.b16 %v373
        %v467 = vunpack.c.l.b16 %v374
        %v468 = vunpack.c.h.b16 %v374
        %v469 = vunpack.c.l.b16 %v375
        %v470 = vunpack.c.h.b16 %v375
        %v471 = vunpack.c.l.b16 %v376
        %v472 = vunpack.c.h.b16 %v376
        %v473 = vunpack.c.l.b16 %v377
        %v474 = vunpack.c.h.b16 %v377
        %v475 = vunpack.c.l.b16 %v378
        %v476 = vunpack.c.h.b16 %v378
        %v477 = vunpack.c.l.b16 %v379
        %v478 = vunpack.c.h.b16 %v379
        %v479 = vunpack.c.l.b16 %v380
        %v480 = vunpack.c.h.b16 %v380
        %v481 = vunpack.c.l.b16 %v381
        %v482 = vunpack.c.h.b16 %v381
        %v483 = vunpack.c.l.b16 %v382
        %v484 = vunpack.c.h.b16 %v382
        %v485 = vunpack.c.l.b16 %v383
        %v486 = vunpack.c.h.b16 %v383
        %v487 = vunpack.c.l.b16 %v384
        %v488 = vunpack.c.h.b16 %v384
        %v489 = vunpack.c.l.b16 %v385
        %v490 = vunpack.c.h.b16 %v385
        %v491 = vunpack.c.l.b16 %v386
        %v492 = vunpack.c.h.b16 %v386
        %v493 = vunpack.c.l.b16 %v387
        %v494 = vunpack.c.h.b16 %v387
        %v495 = vunpack.c.l.b16 %v388
        %v496 = vunpack.c.h.b16 %v388
        %v497 = vunpack.c.l.b16 %v389
        %v498 = vunpack.c.h.b16 %v389
        %v499 = vunpack.c.l.b16 %v390
        %v500 = vunpack.c.h.b16 %v390
        %v501 = vunpack.c.l.b16 %v391
        %v502 = vunpack.c.h.b16 %v391
        %v503 = vunpack.c.l.b16 %v392
        %v504 = vunpack.c.h.b16 %v392
        %v505 = vunpack.c.l.b16 %v393
        %v506 = vunpack.c.h.b16 %v393
        %v507 = vunpack.c.l.b16 %v394
        %v508 = vunpack.c.h.b16 %v394
        %v509 = vunpack.c.l.b16 %v395
        %v510 = vunpack.c.h.b16 %v395
        %v511 = vunpack.c.l.b16 %v396
        %v512 = vunpack.c.h.b16 %v396
        %v513 = vpack.c.b16 %v451, %v449
        %v514 = vpack.c.b16 %v452, %v450
        %v515 = vpack.c.b16 %v455, %v453
        %v516 = vpack.c.b16 %v456, %v454
        %v517 = vpack.c.b16 %v459, %v457
        %v518 = vpack.c.b16 %v460, %v458
        %v519 = vpack.c.b16 %v463, %v461
        %v520 = vpack.c.b16 %v464, %v462
        %v521 = vpack.c.b16 %v467, %v465
        %v522 = vpack.c.b16 %v468, %v466
        %v523 = vpack.c.b16 %v471, %v469
        %v524 = vpack.c.b16 %v472, %v470
        %v525 = vpack.c.b16 %v475, %v473
        %v526 = vpack.c.b16 %v476, %v474
        %v527 = vpack.c.b16 %v479, %v477
        %v528 = vpack.c.b16 %v480, %v478
        %v529 = vpack.c.b16 %v483, %v481
        %v530 = vpack.c.b16 %v484, %v482
        %v531 = vpack.c.b16 %v487, %v485
        %v532 = vpack.c.b16 %v488, %v486
        %v533 = vpack.c.b16 %v491, %v489
        %v534 = vpack.c.b16 %v492, %v490
        %v535 = vpack.c.b16 %v495, %v493
        %v536 = vpack.c.b16 %v496, %v494
        %v537 = vpack.c.b16 %v499, %v497
        %v538 = vpack.c.b16 %v500, %v498
        %v539 = vpack.c.b16 %v503, %v501
        %v540 = vpack.c.b16 %v504, %v502
        %v541 = vpack.c.b16 %v507, %v505
        %v542 = vpack.c.b16 %v508, %v506
        %v543 = vpack.c.b16 %v511, %v509
        %v544 = vpack.c.b16 %v512, %v510
        %577 = vmatprep.subr.bf16.mxu0 0
        %578 = vmatpush1.bf16.msra.mxu0 %v401
        %579 = vmatprep.subr.bf16.mxu0 0
        %580 = vmatpush1.bf16.msra.mxu0 %v402
        %581 = vmatprep.subr.bf16.mxu0 0
        %582 = vmatpush1.bf16.msra.mxu0 %v403
        %583 = vmatprep.subr.bf16.mxu0 0
        %584 = vmatpush1.bf16.msra.mxu0 %v404
        %585 = vmatprep.subr.bf16.mxu0 0
        %586 = vmatpush1.bf16.msra.mxu0 %v405
        %587 = vmatprep.subr.bf16.mxu0 0
        %588 = vmatpush1.bf16.msra.mxu0 %v406
        %589 = vmatprep.subr.bf16.mxu0 0
        %590 = vmatpush1.bf16.msra.mxu0 %v407
        %591 = vmatprep.subr.bf16.mxu0 0
        %592 = vmatpush1.bf16.msra.mxu0 %v408
        %593 = vmatprep.subr.bf16.mxu0 0
        %594 = vmatpush1.bf16.msra.mxu0 %v409
        %595 = vmatprep.subr.bf16.mxu0 0
        %596 = vmatpush1.bf16.msra.mxu0 %v410
        %597 = vmatprep.subr.bf16.mxu0 0
        %598 = vmatpush1.bf16.msra.mxu0 %v411
        %599 = vmatprep.subr.bf16.mxu0 0
        %600 = vmatpush1.bf16.msra.mxu0 %v412
        %601 = vmatprep.subr.bf16.mxu0 0
        %602 = vmatpush1.bf16.msra.mxu0 %v413
        %603 = vmatprep.subr.bf16.mxu0 0
        %604 = vmatpush1.bf16.msra.mxu0 %v414
        %605 = vmatprep.subr.bf16.mxu0 0
        %606 = vmatpush1.bf16.msra.mxu0 %v415
        %607 = vmatprep.subr.bf16.mxu0 0
        %608 = vmatpush1.bf16.msra.mxu0 %v416
        %609 = vmatprep.mubr.bf16.mxu0 %v514
        %610 = vmatmul.mubr.bf16.gmra.mrb[0].mxu0 %v513
        %v611 = vpop.f32.mrb[0].mxu0
        %v612 = vadd.f32 0.0, %v611
        %v613 = vpop.f32.mrb[0].mxu0
        %v614 = vpop.f32.mrb[0].mxu0
        %v615 = vadd.f32 0.0, %v614
        %v616 = vpop.f32.mrb[0].mxu0
        %617 = vmatprep.mubr.bf16.mxu0 %v516
        %618 = vmatmul.mubr.bf16.gmra.mrb[0].mxu0 %v515
        %v619 = vpop.f32.mrb[0].mxu0
        %v620 = vadd.f32 0.0, %v619
        %v621 = vpop.f32.mrb[0].mxu0
        %v622 = vpop.f32.mrb[0].mxu0
        %v623 = vadd.f32 0.0, %v622
        %v624 = vpop.f32.mrb[0].mxu0
        %625 = vmatprep.mubr.bf16.mxu0 %v518
        %626 = vmatmul.mubr.bf16.gmra.mrb[0].mxu0 %v517
        %v627 = vpop.f32.mrb[0].mxu0
        %v628 = vadd.f32 0.0, %v627
        %v629 = vpop.f32.mrb[0].mxu0
        %v630 = vpop.f32.mrb[0].mxu0
        %v631 = vadd.f32 0.0, %v630
        %v632 = vpop.f32.mrb[0].mxu0
        %633 = vmatprep.mubr.bf16.mxu0 %v520
        %634 = vmatmul.mubr.bf16.gmra.mrb[0].mxu0 %v519
        %v635 = vpop.f32.mrb[0].mxu0
        %v636 = vadd.f32 0.0, %v635
        %v637 = vpop.f32.mrb[0].mxu0
        %v638 = vpop.f32.mrb[0].mxu0
        %v639 = vadd.f32 0.0, %v638
        %v640 = vpop.f32.mrb[0].mxu0
        %641 = vmatprep.mubr.bf16.mxu0 %v522
        %642 = vmatmul.mubr.bf16.gmra.mrb[0].mxu0 %v521
        %v643 = vpop.f32.mrb[0].mxu0
        %v644 = vadd.f32 0.0, %v643
        %v645 = vpop.f32.mrb[0].mxu0
        %v646 = vpop.f32.mrb[0].mxu0
        %v647 = vadd.f32 0.0, %v646
        %v648 = vpop.f32.mrb[0].mxu0
        %649 = vmatprep.mubr.bf16.mxu0 %v524
        %650 = vmatmul.mubr.bf16.gmra.mrb[0].mxu0 %v523
        %v651 = vpop.f32.mrb[0].mxu0
        %v652 = vadd.f32 0.0, %v651
        %v653 = vpop.f32.mrb[0].mxu0
        %v654 = vpop.f32.mrb[0].mxu0
        %v655 = vadd.f32 0.0, %v654
        %v656 = vpop.f32.mrb[0].mxu0
        %657 = vmatprep.mubr.bf16.mxu0 %v526
        %658 = vmatmul.mubr.bf16.gmra.mrb[0].mxu0 %v525
        %v659 = vpop.f32.mrb[0].mxu0
        %v660 = vadd.f32 0.0, %v659
        %v661 = vpop.f32.mrb[0].mxu0
        %v662 = vpop.f32.mrb[0].mxu0
        %v663 = vadd.f32 0.0, %v662
        %v664 = vpop.f32.mrb[0].mxu0
        %665 = vmatprep.mubr.bf16.mxu0 %v528
        %666 = vmatmul.mubr.bf16.gmra.mrb[0].mxu0 %v527
        %v667 = vpop.f32.mrb[0].mxu0
        %v668 = vadd.f32 0.0, %v667
        %v669 = vpop.f32.mrb[0].mxu0
        %v670 = vpop.f32.mrb[0].mxu0
        %v671 = vadd.f32 0.0, %v670
        %v672 = vpop.f32.mrb[0].mxu0
        %673 = vmatprep.mubr.bf16.mxu0 %v530
        %674 = vmatmul.mubr.bf16.gmra.mrb[0].mxu0 %v529
        %v675 = vpop.f32.mrb[0].mxu0
        %v676 = vadd.f32 0.0, %v675
        %v677 = vpop.f32.mrb[0].mxu0
        %v678 = vpop.f32.mrb[0].mxu0
        %v679 = vadd.f32 0.0, %v678
        %v680 = vpop.f32.mrb[0].mxu0
        %681 = vmatprep.mubr.bf16.mxu0 %v532
        %682 = vmatmul.mubr.bf16.gmra.mrb[0].mxu0 %v531
        %v683 = vpop.f32.mrb[0].mxu0
        %v684 = vadd.f32 0.0, %v683
        %v685 = vpop.f32.mrb[0].mxu0
        %v686 = vpop.f32.mrb[0].mxu0
        %v687 = vadd.f32 0.0, %v686
        %v688 = vpop.f32.mrb[0].mxu0
        %689 = vmatprep.mubr.bf16.mxu0 %v534
        %690 = vmatmul.mubr.bf16.gmra.mrb[0].mxu0 %v533
        %v691 = vpop.f32.mrb[0].mxu0
        %v692 = vadd.f32 0.0, %v691
        %v693 = vpop.f32.mrb[0].mxu0
        %v694 = vpop.f32.mrb[0].mxu0
        %v695 = vadd.f32 0.0, %v694
        %v696 = vpop.f32.mrb[0].mxu0
        %697 = vmatprep.mubr.bf16.mxu0 %v536
        %698 = vmatmul.mubr.bf16.gmra.mrb[0].mxu0 %v535
        %v699 = vpop.f32.mrb[0].mxu0
        %v700 = vadd.f32 0.0, %v699
        %v701 = vpop.f32.mrb[0].mxu0
        %v702 = vpop.f32.mrb[0].mxu0
        %v703 = vadd.f32 0.0, %v702
        %v704 = vpop.f32.mrb[0].mxu0
        %705 = vmatprep.mubr.bf16.mxu0 %v538
        %706 = vmatmul.mubr.bf16.gmra.mrb[0].mxu0 %v537
        %v707 = vpop.f32.mrb[0].mxu0
        %v708 = vadd.f32 0.0, %v707
        %v709 = vpop.f32.mrb[0].mxu0
        %v710 = vpop.f32.mrb[0].mxu0
        %v711 = vadd.f32 0.0, %v710
        %v712 = vpop.f32.mrb[0].mxu0
        %713 = vmatprep.mubr.bf16.mxu0 %v540
        %714 = vmatmul.mubr.bf16.gmra.mrb[0].mxu0 %v539
        %v715 = vpop.f32.mrb[0].mxu0
        %v716 = vadd.f32 0.0, %v715
        %v717 = vpop.f32.mrb[0].mxu0
        %v718 = vpop.f32.mrb[0].mxu0
        %v719 = vadd.f32 0.0, %v718
        %v720 = vpop.f32.mrb[0].mxu0
        %721 = vmatprep.mubr.bf16.mxu0 %v542
        %722 = vmatmul.mubr.bf16.gmra.mrb[0].mxu0 %v541
        %v723 = vpop.f32.mrb[0].mxu0
        %v724 = vadd.f32 0.0, %v723
        %v725 = vpop.f32.mrb[0].mxu0
        %v726 = vpop.f32.mrb[0].mxu0
        %v727 = vadd.f32 0.0, %v726
        %v728 = vpop.f32.mrb[0].mxu0
        %729 = vmatprep.mubr.bf16.mxu0 %v544
        %730 = vmatmul.mubr.bf16.gmra.mrb[0].mxu0 %v543
        %v731 = vpop.f32.mrb[0].mxu0
        %v732 = vadd.f32 0.0, %v731
        %v733 = vpop.f32.mrb[0].mxu0
        %v734 = vpop.f32.mrb[0].mxu0
        %v735 = vadd.f32 0.0, %v734
        %v736 = vpop.f32.mrb[0].mxu0
        %737 = vdwg.mxu0
        // Predicated region
        $region41: #{lightgcn_forward.1} parent=31 // pred_check
          %p738 = pneg %p215
        $region42: #{lightgcn_forward.1} parent=31 // pred_check_branch
          %740 = sbr.rel (%p738) target = $region44
        $region43: #{lightgcn_forward.1} parent=31 // pred_region
          %741 = vst [vmem:[#allocation3] sm:$0xff] %v612
          %742 = vst [vmem:[#allocation3 + $0x8] sm:$0xff] %v615
          %743 = vst [vmem:[#allocation3 + $0x10] sm:$0xff] %v620
          %744 = vst [vmem:[#allocation3 + $0x18] sm:$0xff] %v623
          %745 = vst [vmem:[#allocation3 + $0x20] sm:$0xff] %v628
          %746 = vst [vmem:[#allocation3 + $0x28] sm:$0xff] %v631
          %747 = vst [vmem:[#allocation3 + $0x30] sm:$0xff] %v636
          %748 = vst [vmem:[#allocation3 + $0x38] sm:$0xff] %v639
          %749 = vst [vmem:[#allocation3 + $0x40] sm:$0xff] %v644
          %750 = vst [vmem:[#allocation3 + $0x48] sm:$0xff] %v647
          %751 = vst [vmem:[#allocation3 + $0x50] sm:$0xff] %v652
          %752 = vst [vmem:[#allocation3 + $0x58] sm:$0xff] %v655
          %753 = vst [vmem:[#allocation3 + $0x60] sm:$0xff] %v660
          %754 = vst [vmem:[#allocation3 + $0x68] sm:$0xff] %v663
          %755 = vst [vmem:[#allocation3 + $0x70] sm:$0xff] %v668
          %756 = vst [vmem:[#allocation3 + $0x78] sm:$0xff] %v671
          %757 = vst [vmem:[#allocation3 + $0x80] sm:$0xff] %v676
          %758 = vst [vmem:[#allocation3 + $0x88] sm:$0xff] %v679
          %759 = vst [vmem:[#allocation3 + $0x90] sm:$0xff] %v684
          %760 = vst [vmem:[#allocation3 + $0x98] sm:$0xff] %v687
          %761 = vst [vmem:[#allocation3 + $0xa0] sm:$0xff] %v692
          %762 = vst [vmem:[#allocation3 + $0xa8] sm:$0xff] %v695
          %763 = vst [vmem:[#allocation3 + $0xb0] sm:$0xff] %v700
          %764 = vst [vmem:[#allocation3 + $0xb8] sm:$0xff] %v703
          %765 = vst [vmem:[#allocation3 + $0xc0] sm:$0xff] %v708
          %766 = vst [vmem:[#allocation3 + $0xc8] sm:$0xff] %v711
          %767 = vst [vmem:[#allocation3 + $0xd0] sm:$0xff] %v716
          %768 = vst [vmem:[#allocation3 + $0xd8] sm:$0xff] %v719
          %769 = vst [vmem:[#allocation3 + $0xe0] sm:$0xff] %v724
          %770 = vst [vmem:[#allocation3 + $0xe8] sm:$0xff] %v727
          %771 = vst [vmem:[#allocation3 + $0xf0] sm:$0xff] %v732
          %772 = vst [vmem:[#allocation3 + $0xf8] sm:$0xff] %v735
        $region44: #{lightgcn_forward.1} parent=31 // pred_fallthru
          _
        %p773 = scmp.ne.s32.totalorder %s22, 0
        // Predicated region
        $region45: #{lightgcn_forward.1} parent=31 // pred_check
          %p774 = pneg %p773
        $region46: #{lightgcn_forward.1} parent=31 // pred_check_branch
          %776 = sbr.rel (%p774) target = $region48
        $region47: #{lightgcn_forward.1} parent=31 // pred_region
          %v777 = vld [vmem:[#allocation3] sm:$0xff]
          %v778 = vld [vmem:[#allocation3 + $0x8] sm:$0xff]
          %v779 = vld [vmem:[#allocation3 + $0x10] sm:$0xff]
          %v780 = vld [vmem:[#allocation3 + $0x18] sm:$0xff]
          %v781 = vld [vmem:[#allocation3 + $0x20] sm:$0xff]
          %v782 = vld [vmem:[#allocation3 + $0x28] sm:$0xff]
          %v783 = vld [vmem:[#allocation3 + $0x30] sm:$0xff]
          %v784 = vld [vmem:[#allocation3 + $0x38] sm:$0xff]
          %v785 = vld [vmem:[#allocation3 + $0x40] sm:$0xff]
          %v786 = vld [vmem:[#allocation3 + $0x48] sm:$0xff]
          %v787 = vld [vmem:[#allocation3 + $0x50] sm:$0xff]
          %v788 = vld [vmem:[#allocation3 + $0x58] sm:$0xff]
          %v789 = vld [vmem:[#allocation3 + $0x60] sm:$0xff]
          %v790 = vld [vmem:[#allocation3 + $0x68] sm:$0xff]
          %v791 = vld [vmem:[#allocation3 + $0x70] sm:$0xff]
          %v792 = vld [vmem:[#allocation3 + $0x78] sm:$0xff]
          %v793 = vld [vmem:[#allocation3 + $0x80] sm:$0xff]
          %v794 = vld [vmem:[#allocation3 + $0x88] sm:$0xff]
          %v795 = vld [vmem:[#allocation3 + $0x90] sm:$0xff]
          %v796 = vld [vmem:[#allocation3 + $0x98] sm:$0xff]
          %v797 = vld [vmem:[#allocation3 + $0xa0] sm:$0xff]
          %v798 = vld [vmem:[#allocation3 + $0xa8] sm:$0xff]
          %v799 = vld [vmem:[#allocation3 + $0xb0] sm:$0xff]
          %v800 = vld [vmem:[#allocation3 + $0xb8] sm:$0xff]
          %v801 = vld [vmem:[#allocation3 + $0xc0] sm:$0xff]
          %v802 = vld [vmem:[#allocation3 + $0xc8] sm:$0xff]
          %v803 = vld [vmem:[#allocation3 + $0xd0] sm:$0xff]
          %v804 = vld [vmem:[#allocation3 + $0xd8] sm:$0xff]
          %v805 = vld [vmem:[#allocation3 + $0xe0] sm:$0xff]
          %v806 = vld [vmem:[#allocation3 + $0xe8] sm:$0xff]
          %v807 = vld [vmem:[#allocation3 + $0xf0] sm:$0xff]
          %v808 = vld [vmem:[#allocation3 + $0xf8] sm:$0xff]
          %v809 = vadd.f32 %v777, %v612
          %v810 = vadd.f32 %v778, %v615
          %v811 = vadd.f32 %v779, %v620
          %v812 = vadd.f32 %v780, %v623
          %v813 = vadd.f32 %v781, %v628
          %v814 = vadd.f32 %v782, %v631
          %v815 = vadd.f32 %v783, %v636
          %v816 = vadd.f32 %v784, %v639
          %v817 = vadd.f32 %v785, %v644
          %v818 = vadd.f32 %v786, %v647
          %v819 = vadd.f32 %v787, %v652
          %v820 = vadd.f32 %v788, %v655
          %v821 = vadd.f32 %v789, %v660
          %v822 = vadd.f32 %v790, %v663
          %v823 = vadd.f32 %v791, %v668
          %v824 = vadd.f32 %v792, %v671
          %v825 = vadd.f32 %v793, %v676
          %v826 = vadd.f32 %v794, %v679
          %v827 = vadd.f32 %v795, %v684
          %v828 = vadd.f32 %v796, %v687
          %v829 = vadd.f32 %v797, %v692
          %v830 = vadd.f32 %v798, %v695
          %v831 = vadd.f32 %v799, %v700
          %v832 = vadd.f32 %v800, %v703
          %v833 = vadd.f32 %v801, %v708
          %v834 = vadd.f32 %v802, %v711
          %v835 = vadd.f32 %v803, %v716
          %v836 = vadd.f32 %v804, %v719
          %v837 = vadd.f32 %v805, %v724
          %v838 = vadd.f32 %v806, %v727
          %v839 = vadd.f32 %v807, %v732
          %v840 = vadd.f32 %v808, %v735
          %841 = vst [vmem:[#allocation3] sm:$0xff] %v809
          %842 = vst [vmem:[#allocation3 + $0x8] sm:$0xff] %v810
          %843 = vst [vmem:[#allocation3 + $0x10] sm:$0xff] %v811
          %844 = vst [vmem:[#allocation3 + $0x18] sm:$0xff] %v812
          %845 = vst [vmem:[#allocation3 + $0x20] sm:$0xff] %v813
          %846 = vst [vmem:[#allocation3 + $0x28] sm:$0xff] %v814
          %847 = vst [vmem:[#allocation3 + $0x30] sm:$0xff] %v815
          %848 = vst [vmem:[#allocation3 + $0x38] sm:$0xff] %v816
          %849 = vst [vmem:[#allocation3 + $0x40] sm:$0xff] %v817
          %850 = vst [vmem:[#allocation3 + $0x48] sm:$0xff] %v818
          %851 = vst [vmem:[#allocation3 + $0x50] sm:$0xff] %v819
          %852 = vst [vmem:[#allocation3 + $0x58] sm:$0xff] %v820
          %853 = vst [vmem:[#allocation3 + $0x60] sm:$0xff] %v821
          %854 = vst [vmem:[#allocation3 + $0x68] sm:$0xff] %v822
          %855 = vst [vmem:[#allocation3 + $0x70] sm:$0xff] %v823
          %856 = vst [vmem:[#allocation3 + $0x78] sm:$0xff] %v824
          %857 = vst [vmem:[#allocation3 + $0x80] sm:$0xff] %v825
          %858 = vst [vmem:[#allocation3 + $0x88] sm:$0xff] %v826
          %859 = vst [vmem:[#allocation3 + $0x90] sm:$0xff] %v827
          %860 = vst [vmem:[#allocation3 + $0x98] sm:$0xff] %v828
          %861 = vst [vmem:[#allocation3 + $0xa0] sm:$0xff] %v829
          %862 = vst [vmem:[#allocation3 + $0xa8] sm:$0xff] %v830
          %863 = vst [vmem:[#allocation3 + $0xb0] sm:$0xff] %v831
          %864 = vst [vmem:[#allocation3 + $0xb8] sm:$0xff] %v832
          %865 = vst [vmem:[#allocation3 + $0xc0] sm:$0xff] %v833
          %866 = vst [vmem:[#allocation3 + $0xc8] sm:$0xff] %v834
          %867 = vst [vmem:[#allocation3 + $0xd0] sm:$0xff] %v835
          %868 = vst [vmem:[#allocation3 + $0xd8] sm:$0xff] %v836
          %869 = vst [vmem:[#allocation3 + $0xe0] sm:$0xff] %v837
          %870 = vst [vmem:[#allocation3 + $0xe8] sm:$0xff] %v838
          %871 = vst [vmem:[#allocation3 + $0xf0] sm:$0xff] %v839
          %872 = vst [vmem:[#allocation3 + $0xf8] sm:$0xff] %v840
        $region48: #{lightgcn_forward.1} parent=31 // pred_fallthru
          _
        // Predicated region
        $region49: #{lightgcn_forward.1} parent=31 // pred_check
          %p873 = pneg %p215
        $region50: #{lightgcn_forward.1} parent=31 // pred_check_branch
          %875 = sbr.rel (%p873) target = $region52
        $region51: #{lightgcn_forward.1} parent=31 // pred_region
          %v876 = vld [vmem:[#allocation3] sm:$0xff]
          %v877 = vld [vmem:[#allocation3 + $0x8] sm:$0xff]
          %v878 = vld [vmem:[#allocation3 + $0x10] sm:$0xff]
          %v879 = vld [vmem:[#allocation3 + $0x18] sm:$0xff]
          %v880 = vld [vmem:[#allocation3 + $0x20] sm:$0xff]
          %v881 = vld [vmem:[#allocation3 + $0x28] sm:$0xff]
          %v882 = vld [vmem:[#allocation3 + $0x30] sm:$0xff]
          %v883 = vld [vmem:[#allocation3 + $0x38] sm:$0xff]
          %v884 = vld [vmem:[#allocation3 + $0x40] sm:$0xff]
          %v885 = vld [vmem:[#allocation3 + $0x48] sm:$0xff]
          %v886 = vld [vmem:[#allocation3 + $0x50] sm:$0xff]
          %v887 = vld [vmem:[#allocation3 + $0x58] sm:$0xff]
          %v888 = vld [vmem:[#allocation3 + $0x60] sm:$0xff]
          %v889 = vld [vmem:[#allocation3 + $0x68] sm:$0xff]
          %v890 = vld [vmem:[#allocation3 + $0x70] sm:$0xff]
          %v891 = vld [vmem:[#allocation3 + $0x78] sm:$0xff]
          %v892 = vld [vmem:[#allocation3 + $0x80] sm:$0xff]
          %v893 = vld [vmem:[#allocation3 + $0x88] sm:$0xff]
          %v894 = vld [vmem:[#allocation3 + $0x90] sm:$0xff]
          %v895 = vld [vmem:[#allocation3 + $0x98] sm:$0xff]
          %v896 = vld [vmem:[#allocation3 + $0xa0] sm:$0xff]
          %v897 = vld [vmem:[#allocation3 + $0xa8] sm:$0xff]
          %v898 = vld [vmem:[#allocation3 + $0xb0] sm:$0xff]
          %v899 = vld [vmem:[#allocation3 + $0xb8] sm:$0xff]
          %v900 = vld [vmem:[#allocation3 + $0xc0] sm:$0xff]
          %v901 = vld [vmem:[#allocation3 + $0xc8] sm:$0xff]
          %v902 = vld [vmem:[#allocation3 + $0xd0] sm:$0xff]
          %v903 = vld [vmem:[#allocation3 + $0xd8] sm:$0xff]
          %v904 = vld [vmem:[#allocation3 + $0xe0] sm:$0xff]
          %v905 = vld [vmem:[#allocation3 + $0xe8] sm:$0xff]
          %v906 = vld [vmem:[#allocation3 + $0xf0] sm:$0xff]
          %v907 = vld [vmem:[#allocation3 + $0xf8] sm:$0xff]
          %s908 = ssub.s32 1, %s361
          %s909 = smul.u32 %s908, 256
          %s910 = smul.u32 %s21, 256
          %s911 = sadd.s32 %s909, %s910
          %v912 = vpack.c.bf16 %v877, %v876
          %v913 = vpack.c.bf16 %v879, %v878
          %v914 = vpack.c.bf16 %v881, %v880
          %v915 = vpack.c.bf16 %v883, %v882
          %v916 = vpack.c.bf16 %v885, %v884
          %v917 = vpack.c.bf16 %v887, %v886
          %v918 = vpack.c.bf16 %v889, %v888
          %v919 = vpack.c.bf16 %v891, %v890
          %v920 = vpack.c.bf16 %v893, %v892
          %v921 = vpack.c.bf16 %v895, %v894
          %v922 = vpack.c.bf16 %v897, %v896
          %v923 = vpack.c.bf16 %v899, %v898
          %v924 = vpack.c.bf16 %v901, %v900
          %v925 = vpack.c.bf16 %v903, %v902
          %v926 = vpack.c.bf16 %v905, %v904
          %v927 = vpack.c.bf16 %v907, %v906
          %s928 = sshra.s32 %s911, 4
          %s929 = sand.u32 %s911, 15
          %s930 = smul.addr %s928, 8
          %s931 = scalar_lea.vmem [#allocation2], %s930
          %932 = vst [vmem:[%s931] sm:$0xff] %v912
          %933 = vst [vmem:[%s931 + $0x8] sm:$0xff] %v913
          %934 = vst [vmem:[%s931 + $0x10] sm:$0xff] %v914
          %935 = vst [vmem:[%s931 + $0x18] sm:$0xff] %v915
          %936 = vst [vmem:[%s931 + $0x20] sm:$0xff] %v916
          %937 = vst [vmem:[%s931 + $0x28] sm:$0xff] %v917
          %938 = vst [vmem:[%s931 + $0x30] sm:$0xff] %v918
          %939 = vst [vmem:[%s931 + $0x38] sm:$0xff] %v919
          %940 = vst [vmem:[%s931 + $0x40] sm:$0xff] %v920
          %941 = vst [vmem:[%s931 + $0x48] sm:$0xff] %v921
          %942 = vst [vmem:[%s931 + $0x50] sm:$0xff] %v922
          %943 = vst [vmem:[%s931 + $0x58] sm:$0xff] %v923
          %944 = vst [vmem:[%s931 + $0x60] sm:$0xff] %v924
          %945 = vst [vmem:[%s931 + $0x68] sm:$0xff] %v925
          %946 = vst [vmem:[%s931 + $0x70] sm:$0xff] %v926
          %947 = vst [vmem:[%s931 + $0x78] sm:$0xff] %v927
          %s948 = scalar_lea.vmem %s3, %s910
          %v949 = vld [vmem:[%s948] sm:$0xff]
          %v950 = vld [vmem:[%s948 + $0x8] sm:$0xff]
          %v951 = vld [vmem:[%s948 + $0x10] sm:$0xff]
          %v952 = vld [vmem:[%s948 + $0x18] sm:$0xff]
          %v953 = vld [vmem:[%s948 + $0x20] sm:$0xff]
          %v954 = vld [vmem:[%s948 + $0x28] sm:$0xff]
          %v955 = vld [vmem:[%s948 + $0x30] sm:$0xff]
          %v956 = vld [vmem:[%s948 + $0x38] sm:$0xff]
          %v957 = vld [vmem:[%s948 + $0x40] sm:$0xff]
          %v958 = vld [vmem:[%s948 + $0x48] sm:$0xff]
          %v959 = vld [vmem:[%s948 + $0x50] sm:$0xff]
          %v960 = vld [vmem:[%s948 + $0x58] sm:$0xff]
          %v961 = vld [vmem:[%s948 + $0x60] sm:$0xff]
          %v962 = vld [vmem:[%s948 + $0x68] sm:$0xff]
          %v963 = vld [vmem:[%s948 + $0x70] sm:$0xff]
          %v964 = vld [vmem:[%s948 + $0x78] sm:$0xff]
          %v965 = vld [vmem:[%s948 + $0x80] sm:$0xff]
          %v966 = vld [vmem:[%s948 + $0x88] sm:$0xff]
          %v967 = vld [vmem:[%s948 + $0x90] sm:$0xff]
          %v968 = vld [vmem:[%s948 + $0x98] sm:$0xff]
          %v969 = vld [vmem:[%s948 + $0xa0] sm:$0xff]
          %v970 = vld [vmem:[%s948 + $0xa8] sm:$0xff]
          %v971 = vld [vmem:[%s948 + $0xb0] sm:$0xff]
          %v972 = vld [vmem:[%s948 + $0xb8] sm:$0xff]
          %v973 = vld [vmem:[%s948 + $0xc0] sm:$0xff]
          %v974 = vld [vmem:[%s948 + $0xc8] sm:$0xff]
          %v975 = vld [vmem:[%s948 + $0xd0] sm:$0xff]
          %v976 = vld [vmem:[%s948 + $0xd8] sm:$0xff]
          %v977 = vld [vmem:[%s948 + $0xe0] sm:$0xff]
          %v978 = vld [vmem:[%s948 + $0xe8] sm:$0xff]
          %v979 = vld [vmem:[%s948 + $0xf0] sm:$0xff]
          %v980 = vld [vmem:[%s948 + $0xf8] sm:$0xff]
          %s981 = sadd.s32 %s20, 1
          %s982 = sld [smem:[#allocation4 + %s981]]
          %v983 = vstv %s982
          %v984 = vmul.f32 %v983, %v876
          %v985 = vmul.f32 %v983, %v877
          %v986 = vmul.f32 %v983, %v878
          %v987 = vmul.f32 %v983, %v879
          %v988 = vmul.f32 %v983, %v880
          %v989 = vmul.f32 %v983, %v881
          %v990 = vmul.f32 %v983, %v882
          %v991 = vmul.f32 %v983, %v883
          %v992 = vmul.f32 %v983, %v884
          %v993 = vmul.f32 %v983, %v885
          %v994 = vmul.f32 %v983, %v886
          %v995 = vmul.f32 %v983, %v887
          %v996 = vmul.f32 %v983, %v888
          %v997 = vmul.f32 %v983, %v889
          %v998 = vmul.f32 %v983, %v890
          %v999 = vmul.f32 %v983, %v891
          %v1000 = vmul.f32 %v983, %v892
          %v1001 = vmul.f32 %v983, %v893
          %v1002 = vmul.f32 %v983, %v894
          %v1003 = vmul.f32 %v983, %v895
          %v1004 = vmul.f32 %v983, %v896
          %v1005 = vmul.f32 %v983, %v897
          %v1006 = vmul.f32 %v983, %v898
          %v1007 = vmul.f32 %v983, %v899
          %v1008 = vmul.f32 %v983, %v900
          %v1009 = vmul.f32 %v983, %v901
          %v1010 = vmul.f32 %v983, %v902
          %v1011 = vmul.f32 %v983, %v903
          %v1012 = vmul.f32 %v983, %v904
          %v1013 = vmul.f32 %v983, %v905
          %v1014 = vmul.f32 %v983, %v906
          %v1015 = vmul.f32 %v983, %v907
          %v1016 = vadd.f32 %v949, %v984
          %v1017 = vadd.f32 %v950, %v985
          %v1018 = vadd.f32 %v951, %v986
          %v1019 = vadd.f32 %v952, %v987
          %v1020 = vadd.f32 %v953, %v988
          %v1021 = vadd.f32 %v954, %v989
          %v1022 = vadd.f32 %v955, %v990
          %v1023 = vadd.f32 %v956, %v991
          %v1024 = vadd.f32 %v957, %v992
          %v1025 = vadd.f32 %v958, %v993
          %v1026 = vadd.f32 %v959, %v994
          %v1027 = vadd.f32 %v960, %v995
          %v1028 = vadd.f32 %v961, %v996
          %v1029 = vadd.f32 %v962, %v997
          %v1030 = vadd.f32 %v963, %v998
          %v1031 = vadd.f32 %v964, %v999
          %v1032 = vadd.f32 %v965, %v1000
          %v1033 = vadd.f32 %v966, %v1001
          %v1034 = vadd.f32 %v967, %v1002
          %v1035 = vadd.f32 %v968, %v1003
          %v1036 = vadd.f32 %v969, %v1004
          %v1037 = vadd.f32 %v970, %v1005
          %v1038 = vadd.f32 %v971, %v1006
          %v1039 = vadd.f32 %v972, %v1007
          %v1040 = vadd.f32 %v973, %v1008
          %v1041 = vadd.f32 %v974, %v1009
          %v1042 = vadd.f32 %v975, %v1010
          %v1043 = vadd.f32 %v976, %v1011
          %v1044 = vadd.f32 %v977, %v1012
          %v1045 = vadd.f32 %v978, %v1013
          %v1046 = vadd.f32 %v979, %v1014
          %v1047 = vadd.f32 %v980, %v1015
          %1048 = vst [vmem:[%s948] sm:$0xff] %v1016
          %1049 = vst [vmem:[%s948 + $0x8] sm:$0xff] %v1017
          %1050 = vst [vmem:[%s948 + $0x10] sm:$0xff] %v1018
          %1051 = vst [vmem:[%s948 + $0x18] sm:$0xff] %v1019
          %1052 = vst [vmem:[%s948 + $0x20] sm:$0xff] %v1020
          %1053 = vst [vmem:[%s948 + $0x28] sm:$0xff] %v1021
          %1054 = vst [vmem:[%s948 + $0x30] sm:$0xff] %v1022
          %1055 = vst [vmem:[%s948 + $0x38] sm:$0xff] %v1023
          %1056 = vst [vmem:[%s948 + $0x40] sm:$0xff] %v1024
          %1057 = vst [vmem:[%s948 + $0x48] sm:$0xff] %v1025
          %1058 = vst [vmem:[%s948 + $0x50] sm:$0xff] %v1026
          %1059 = vst [vmem:[%s948 + $0x58] sm:$0xff] %v1027
          %1060 = vst [vmem:[%s948 + $0x60] sm:$0xff] %v1028
          %1061 = vst [vmem:[%s948 + $0x68] sm:$0xff] %v1029
          %1062 = vst [vmem:[%s948 + $0x70] sm:$0xff] %v1030
          %1063 = vst [vmem:[%s948 + $0x78] sm:$0xff] %v1031
          %1064 = vst [vmem:[%s948 + $0x80] sm:$0xff] %v1032
          %1065 = vst [vmem:[%s948 + $0x88] sm:$0xff] %v1033
          %1066 = vst [vmem:[%s948 + $0x90] sm:$0xff] %v1034
          %1067 = vst [vmem:[%s948 + $0x98] sm:$0xff] %v1035
          %1068 = vst [vmem:[%s948 + $0xa0] sm:$0xff] %v1036
          %1069 = vst [vmem:[%s948 + $0xa8] sm:$0xff] %v1037
          %1070 = vst [vmem:[%s948 + $0xb0] sm:$0xff] %v1038
          %1071 = vst [vmem:[%s948 + $0xb8] sm:$0xff] %v1039
          %1072 = vst [vmem:[%s948 + $0xc0] sm:$0xff] %v1040
          %1073 = vst [vmem:[%s948 + $0xc8] sm:$0xff] %v1041
          %1074 = vst [vmem:[%s948 + $0xd0] sm:$0xff] %v1042
          %1075 = vst [vmem:[%s948 + $0xd8] sm:$0xff] %v1043
          %1076 = vst [vmem:[%s948 + $0xe0] sm:$0xff] %v1044
          %1077 = vst [vmem:[%s948 + $0xe8] sm:$0xff] %v1045
          %1078 = vst [vmem:[%s948 + $0xf0] sm:$0xff] %v1046
          %1079 = vst [vmem:[%s948 + $0xf8] sm:$0xff] %v1047
        $region52: #{lightgcn_forward.1} parent=31 // pred_fallthru
          _
        // Predicated region
        $region53: #{lightgcn_forward.1} parent=31 // pred_check
          %p1080 = pneg %p117
        $region54: #{lightgcn_forward.1} parent=31 // pred_check_branch
          %1082 = sbr.rel (%p1080) target = $region56
        $region55: #{lightgcn_forward.1} parent=31 // pred_region
          _
        $region56: #{lightgcn_forward.1} parent=31 // pred_fallthru
          _
        // Predicated region
        $region57: #{lightgcn_forward.1} parent=31 // pred_check
          %p1083 = pneg %p117
        $region58: #{lightgcn_forward.1} parent=31 // pred_check_branch
          %1085 = sbr.rel (%p1083) target = $region60
        $region59: #{lightgcn_forward.1} parent=31 // pred_region
          _
        $region60: #{lightgcn_forward.1} parent=31 // pred_fallthru
          _
      $region32: #{lightgcn_forward.1} parent=5 // pred_fallthru
        _
      %p1086 = scmp.le.s32.totalorder 2, %s10
      // Predicated region
      $region61: #{lightgcn_forward.1} parent=5 // pred_check
        %p1087 = pneg %p1086
      $region62: #{lightgcn_forward.1} parent=5 // pred_check_branch
        %1089 = sbr.rel (%p1087) target = $region64
      $region63: #{lightgcn_forward.1} parent=5 // pred_region
        %s1090 = ssub.s32 %s10, 2
      $region64: #{lightgcn_forward.1} parent=5 // pred_fallthru
        _
    $region6: #{lightgcn_forward.1} parent=1 // loop_footer
      %s14 = sadd.s32 1, %s10
    $region7: #{lightgcn_forward.1} parent=1 // loop_footer_branch
      %9 = sbr.rel target = $region3
    $region8: #{lightgcn_forward.1} parent=1 // loop_exit
      _
    %1091 = vsyncpa [#allocation5], 1
    %s1092 = scalar_lea.sflag [#allocation5], 1
    %1093 = vsyncpa %s1092, 1

</llo_original>
